<compile_context>
chip_gen: v5e
topology: v5e:2x2
jax: 0.10.0
libtpu: 0.0.40
codegen_flags: <defaults>
</compile_context>

<pallas_src>
import functools

import jax
import jax.numpy as jnp
from jax.experimental import pallas as pl
from jax.experimental.pallas import tpu as pltpu

_LANE = 128  # batch tile granularity (lane width)


def _round_up(x, m):
    return -(-x // m) * m


def _a2c_kernel(xt_ref,
                w1t_ref, b1t_ref,
                w2t_ref, b2t_ref,
                wht_ref, bht_ref,
                out_ref,
                *, num_actions, obs_features):
    xt = xt_ref[...]            # (obs, tb)   batch on lanes
    w1t = w1t_ref[...]          # (128, obs)

    # Layer 1: K = obs_features is tiny -> VPU broadcast-FMAs, no MXU push.
    h1 = b1t_ref[...] + w1t[:, 0:1] * xt[0:1, :]
    for k in range(1, obs_features):
        h1 = h1 + w1t[:, k:k + 1] * xt[k:k + 1, :]
    h1 = jnp.maximum(h1, 0.0)   # (128, tb)

    # Layer 2 on the MXU: (64,128) @ (128,tb).
    h2 = jnp.dot(w2t_ref[...], h1, preferred_element_type=jnp.float32) + b2t_ref[...]
    h2 = jnp.maximum(h2, 0.0)   # (64, tb)

    # Fused actor+critic head, already slab-shaped:
    # rows [0,A) = logits, rows [A,2A) = zeros (probs land there), row 2A = value.
    head = jnp.dot(wht_ref[...], h2, preferred_element_type=jnp.float32) + bht_ref[...]

    # Numerically stable softmax along the sublane (feature) axis.
    logits = head[:num_actions, :]
    m = jnp.max(logits, axis=0, keepdims=True)
    e = jnp.exp(logits - m)
    probs = e * pl.reciprocal(jnp.sum(e, axis=0, keepdims=True), approx=False)

    out_ref[...] = head                                   # one lane-dense slab store
    out_ref[pl.ds(num_actions, num_actions), :] = probs   # overwrite the probs rows


def cartpole_a2c_forward(x, params, *, block_b=1024):
    """A2C forward pass. Returns (policy_logits, policy_probs, state_value)."""
    B, obs_features = x.shape
    num_actions = params["wa"].shape[1]
    slab_rows = _round_up(2 * num_actions + 1, 8)

    # Batch lives on the lane axis: tile is a multiple of 128.  Cap the tile at
    # round_up(cdiv(B,2),128) so the "parallel" grid has >=2 steps when the batch
    # allows (v7x megacore); raise block_b (512/1024/2048) for large rollouts.
    tb = min(block_b, max(_LANE, _round_up(-(-B // 2), _LANE)))
    b_padded = _round_up(B, tb)
    grid = (b_padded // tb,)

    xt = jnp.pad(x.T, ((0, 0), (0, b_padded - B)))        # (obs, b_padded)

    resident = lambda arr: pl.BlockSpec(arr.shape, lambda i: (0, 0))

    slab = pl.pallas_call(
        functools.partial(_a2c_kernel,
                          num_actions=num_actions, obs_features=obs_features),
        out_shape=jax.ShapeDtypeStruct((slab_rows, b_padded), jnp.float32),
        grid=grid,
        in_specs=[
            pl.BlockSpec((obs_features, tb), lambda i: (0, i)),   # observations^T
            resident(params["w1t"]), resident(params["b1t"]),
            resident(params["w2t"]), resident(params["b2t"]),
            resident(params["wht"]), resident(params["bht"]),
        ],
        out_specs=pl.BlockSpec((slab_rows, tb), lambda i: (0, i)),
        compiler_params=pltpu.CompilerParams(
            dimension_semantics=("parallel",)),
    )(xt,
      params["w1t"], params["b1t"],
      params["w2t"], params["b2t"],
      params["wht"], params["bht"])

    logits = slab[:num_actions, :B].T
    probs = slab[num_actions:2 * num_actions, :B].T
    value = slab[2 * num_actions:2 * num_actions + 1, :B].T
    return logits, probs, value


def init_params(key, obs_features, num_actions, hidden_feature=64):
    """Deterministic synthetic parameters matching the module's layer shapes."""
    ks = jax.random.split(key, 8)

    def lin(kw, kb, fan_in, fan_out):
        bound = 1.0 / jnp.sqrt(fan_in)
        w = jax.random.uniform(kw, (fan_in, fan_out), jnp.float32, -bound, bound)
        b = jax.random.uniform(kb, (1, fan_out), jnp.float32, -bound, bound)
        return w, b

    w1, b1 = lin(ks[0], ks[1], obs_features, 128)
    w2, b2 = lin(ks[2], ks[3], 128, hidden_feature)
    wa, ba = lin(ks[4], ks[5], hidden_feature, num_actions)
    wc, bc = lin(ks[6], ks[7], hidden_feature, 1)

    # Fused, transposed, slab-padded head (built once at init):
    #   rows [0,A)   actor weights (logits)
    #   rows [A,2A)  zeros         (probs written in-kernel)
    #   row  2A      critic weights (value)
    #   rest         zero sublane padding up to a multiple of 8
    slab_rows = _round_up(2 * num_actions + 1, 8)
    wht = jnp.zeros((slab_rows, hidden_feature), jnp.float32)
    wht = wht.at[:num_actions].set(wa.T)
    wht = wht.at[2 * num_actions].set(wc[:, 0])
    bht = jnp.zeros((slab_rows, 1), jnp.float32)
    bht = bht.at[:num_actions, 0].set(ba[0])
    bht = bht.at[2 * num_actions, 0].set(bc[0, 0])

    return {"w1": w1, "b1": b1, "w2": w2, "b2": b2,
            "wa": wa, "ba": ba, "wc": wc, "bc": bc,
            "w1t": w1.T, "b1t": b1.T, "w2t": w2.T, "b2t": b2.T,
            "wht": wht, "bht": bht}


def _reference(x, p):
    h1 = jnp.maximum(x @ p["w1"] + p["b1"], 0.0)
    h2 = jnp.maximum(h1 @ p["w2"] + p["b2"], 0.0)
    logits = h2 @ p["wa"] + p["ba"]
    probs = jax.nn.softmax(logits, axis=-1)
    value = h2 @ p["wc"] + p["bc"]
    return logits, probs, value


if __name__ == "__main__":
    # CartPole-v1: 4 observation features, 2 discrete actions.
    batch, obs_features, num_actions = 8, 4, 2

    key = jax.random.PRNGKey(0)
    k_obs, k_params = jax.random.split(key)
    x = jax.random.normal(k_obs, (batch, obs_features), dtype=jnp.float32)
    params = init_params(k_params, obs_features, num_actions)

    logits, probs, value = jax.block_until_ready(cartpole_a2c_forward(x, params))

    ref_logits, ref_probs, ref_value = _reference(x, params)
    assert logits.shape == (batch, num_actions)
    assert probs.shape == (batch, num_actions)
    assert value.shape == (batch, 1)
    assert jnp.allclose(logits, ref_logits, atol=1e-5, rtol=1e-5)
    assert jnp.allclose(probs, ref_probs, atol=1e-5, rtol=1e-5)
    assert jnp.allclose(value, ref_value, atol=1e-5, rtol=1e-5)

    print("KERNEL_OK")
</pallas_src>

<mosaic_0001>
module attributes {stable_mosaic.version = 11 : i64} {
  func.func @_a2c_kernel(%arg0: i32, %arg1: memref<4x128xf32, #tpu.memory_space<vmem>>, %arg2: memref<128x4xf32, #tpu.memory_space<vmem>>, %arg3: memref<128x1xf32, #tpu.memory_space<vmem>>, %arg4: memref<64x128xf32, #tpu.memory_space<vmem>>, %arg5: memref<64x1xf32, #tpu.memory_space<vmem>>, %arg6: memref<8x64xf32, #tpu.memory_space<vmem>>, %arg7: memref<8x1xf32, #tpu.memory_space<vmem>>, %arg8: memref<8x128xf32, #tpu.memory_space<vmem>>) attributes {dimension_semantics = [#tpu.dimension_semantics<parallel>], iteration_bounds = array<i64: 1>, scalar_prefetch = 0 : i64, scratch_operands = 0 : i64, tpu.core_type = #tpu.core_type<tc>, window_params = [{transform_indices = @transform_0, window_bounds = array<i64: 4, 128>}, {pipeline_mode = #tpu.pipeline_mode<synchronous>, transform_indices = @transform_1, window_bounds = array<i64: 128, 4>}, {pipeline_mode = #tpu.pipeline_mode<synchronous>, transform_indices = @transform_2, window_bounds = array<i64: 128, 1>}, {pipeline_mode = #tpu.pipeline_mode<synchronous>, transform_indices = @transform_3, window_bounds = array<i64: 64, 128>}, {pipeline_mode = #tpu.pipeline_mode<synchronous>, transform_indices = @transform_4, window_bounds = array<i64: 64, 1>}, {pipeline_mode = #tpu.pipeline_mode<synchronous>, transform_indices = @transform_5, window_bounds = array<i64: 8, 64>}, {pipeline_mode = #tpu.pipeline_mode<synchronous>, transform_indices = @transform_6, window_bounds = array<i64: 8, 1>}, {transform_indices = @transform_7, window_bounds = array<i64: 8, 128>}]} {
    %c0 = arith.constant 0 : index
    %c0_0 = arith.constant 0 : index
    %0 = vector.load %arg1[%c0, %c0_0] : memref<4x128xf32, #tpu.memory_space<vmem>>, vector<4x128xf32>
    %c0_1 = arith.constant 0 : index
    %c0_2 = arith.constant 0 : index
    %1 = vector.load %arg2[%c0_1, %c0_2] : memref<128x4xf32, #tpu.memory_space<vmem>>, vector<128x4xf32>
    %c0_3 = arith.constant 0 : index
    %c0_4 = arith.constant 0 : index
    %2 = vector.load %arg3[%c0_3, %c0_4] : memref<128x1xf32, #tpu.memory_space<vmem>>, vector<128x1xf32>
    %3 = vector.extract_strided_slice %1 {offsets = [0, 0], sizes = [128, 1], strides = [1, 1]} : vector<128x4xf32> to vector<128x1xf32>
    %4 = vector.extract_strided_slice %0 {offsets = [0, 0], sizes = [1, 128], strides = [1, 1]} : vector<4x128xf32> to vector<1x128xf32>
    %5 = vector.broadcast %3 : vector<128x1xf32> to vector<128x128xf32>
    %6 = vector.broadcast %4 : vector<1x128xf32> to vector<128x128xf32>
    %7 = arith.mulf %5, %6 : vector<128x128xf32>
    %8 = vector.broadcast %2 : vector<128x1xf32> to vector<128x128xf32>
    %9 = arith.addf %8, %7 : vector<128x128xf32>
    %10 = vector.extract_strided_slice %1 {offsets = [0, 1], sizes = [128, 1], strides = [1, 1]} : vector<128x4xf32> to vector<128x1xf32>
    %11 = vector.extract_strided_slice %0 {offsets = [1, 0], sizes = [1, 128], strides = [1, 1]} : vector<4x128xf32> to vector<1x128xf32>
    %12 = vector.broadcast %10 : vector<128x1xf32> to vector<128x128xf32>
    %13 = vector.broadcast %11 : vector<1x128xf32> to vector<128x128xf32>
    %14 = arith.mulf %12, %13 : vector<128x128xf32>
    %15 = arith.addf %9, %14 : vector<128x128xf32>
    %16 = vector.extract_strided_slice %1 {offsets = [0, 2], sizes = [128, 1], strides = [1, 1]} : vector<128x4xf32> to vector<128x1xf32>
    %17 = vector.extract_strided_slice %0 {offsets = [2, 0], sizes = [1, 128], strides = [1, 1]} : vector<4x128xf32> to vector<1x128xf32>
    %18 = vector.broadcast %16 : vector<128x1xf32> to vector<128x128xf32>
    %19 = vector.broadcast %17 : vector<1x128xf32> to vector<128x128xf32>
    %20 = arith.mulf %18, %19 : vector<128x128xf32>
    %21 = arith.addf %15, %20 : vector<128x128xf32>
    %22 = vector.extract_strided_slice %1 {offsets = [0, 3], sizes = [128, 1], strides = [1, 1]} : vector<128x4xf32> to vector<128x1xf32>
    %23 = vector.extract_strided_slice %0 {offsets = [3, 0], sizes = [1, 128], strides = [1, 1]} : vector<4x128xf32> to vector<1x128xf32>
    %24 = vector.broadcast %22 : vector<128x1xf32> to vector<128x128xf32>
    %25 = vector.broadcast %23 : vector<1x128xf32> to vector<128x128xf32>
    %26 = arith.mulf %24, %25 : vector<128x128xf32>
    %27 = arith.addf %21, %26 : vector<128x128xf32>
    %cst = arith.constant 0.000000e+00 : f32
    %28 = vector.broadcast %cst : f32 to vector<128x128xf32>
    %29 = arith.maximumf %27, %28 : vector<128x128xf32>
    %c0_5 = arith.constant 0 : index
    %c0_6 = arith.constant 0 : index
    %30 = vector.load %arg4[%c0_5, %c0_6] : memref<64x128xf32, #tpu.memory_space<vmem>>, vector<64x128xf32>
    %cst_7 = arith.constant dense<0.000000e+00> : vector<64x128xf32>
    %31 = tpu.matmul %30, %29, %cst_7 {dimension_numbers = #tpu.dot_dimension_numbers<[1], [0], [0], [1], [0, 0, 1, 1], [], []>} : vector<64x128xf32>, vector<128x128xf32>, vector<64x128xf32> -> vector<64x128xf32>
    %c0_8 = arith.constant 0 : index
    %c0_9 = arith.constant 0 : index
    %32 = vector.load %arg5[%c0_8, %c0_9] : memref<64x1xf32, #tpu.memory_space<vmem>>, vector<64x1xf32>
    %33 = vector.broadcast %32 : vector<64x1xf32> to vector<64x128xf32>
    %34 = arith.addf %31, %33 : vector<64x128xf32>
    %cst_10 = arith.constant 0.000000e+00 : f32
    %35 = vector.broadcast %cst_10 : f32 to vector<64x128xf32>
    %36 = arith.maximumf %34, %35 : vector<64x128xf32>
    %c0_11 = arith.constant 0 : index
    %c0_12 = arith.constant 0 : index
    %37 = vector.load %arg6[%c0_11, %c0_12] : memref<8x64xf32, #tpu.memory_space<vmem>>, vector<8x64xf32>
    %cst_13 = arith.constant dense<0.000000e+00> : vector<8x128xf32>
    %38 = tpu.matmul %37, %36, %cst_13 {dimension_numbers = #tpu.dot_dimension_numbers<[1], [0], [0], [1], [0, 0, 1, 1], [], []>} : vector<8x64xf32>, vector<64x128xf32>, vector<8x128xf32> -> vector<8x128xf32>
    %c0_14 = arith.constant 0 : index
    %c0_15 = arith.constant 0 : index
    %39 = vector.load %arg7[%c0_14, %c0_15] : memref<8x1xf32, #tpu.memory_space<vmem>>, vector<8x1xf32>
    %40 = vector.broadcast %39 : vector<8x1xf32> to vector<8x128xf32>
    %41 = arith.addf %38, %40 : vector<8x128xf32>
    %42 = vector.extract_strided_slice %41 {offsets = [0, 0], sizes = [2, 128], strides = [1, 1]} : vector<8x128xf32> to vector<2x128xf32>
    %cst_16 = arith.constant dense<0xFF800000> : vector<128xf32>
    %43 = vector.multi_reduction <maximumf>, %42, %cst_16 [0] : vector<2x128xf32> to vector<128xf32>
    %44 = vector.shape_cast %43 : vector<128xf32> to vector<1x128xf32>
    %45 = vector.broadcast %44 : vector<1x128xf32> to vector<2x128xf32>
    %46 = arith.subf %42, %45 : vector<2x128xf32>
    %47 = math.exp %46 : vector<2x128xf32>
    %cst_17 = arith.constant dense<0.000000e+00> : vector<128xf32>
    %48 = vector.multi_reduction <add>, %47, %cst_17 [0] : vector<2x128xf32> to vector<128xf32>
    %49 = vector.shape_cast %48 : vector<128xf32> to vector<1x128xf32>
    %50 = tpu.reciprocal %49 : vector<1x128xf32> -> vector<1x128xf32>
    %51 = vector.broadcast %50 : vector<1x128xf32> to vector<2x128xf32>
    %52 = arith.mulf %47, %51 : vector<2x128xf32>
    %c0_18 = arith.constant 0 : index
    %c0_19 = arith.constant 0 : index
    %53 = vector.load %arg8[%c0_18, %c0_19] : memref<8x128xf32, #tpu.memory_space<vmem>>, vector<8x128xf32>
    tpu.vector_store %arg8[%c0_18, %c0_19], %41 {strides = array<i32>} : memref<8x128xf32, #tpu.memory_space<vmem>>, vector<8x128xf32>,
    %c2 = arith.constant 2 : index
    %c0_20 = arith.constant 0 : index
    %54 = vector.load %arg8[%c2, %c0_20] : memref<8x128xf32, #tpu.memory_space<vmem>>, vector<2x128xf32>
    tpu.vector_store %arg8[%c2, %c0_20], %52 {strides = array<i32>} : memref<8x128xf32, #tpu.memory_space<vmem>>, vector<2x128xf32>,
    return
  }
  func.func @transform_0(%arg0: i32) -> (i32, i32) {
    %c0_i32 = arith.constant 0 : i32
    %c0_i32_0 = arith.constant 0 : i32
    return %c0_i32, %arg0 : i32, i32
  }
  func.func @transform_1(%arg0: i32) -> (i32, i32) {
    %c0_i32 = arith.constant 0 : i32
    %c0_i32_0 = arith.constant 0 : i32
    %c0_i32_1 = arith.constant 0 : i32
    return %c0_i32, %c0_i32_0 : i32, i32
  }
  func.func @transform_2(%arg0: i32) -> (i32, i32) {
    %c0_i32 = arith.constant 0 : i32
    %c0_i32_0 = arith.constant 0 : i32
    %c0_i32_1 = arith.constant 0 : i32
    return %c0_i32, %c0_i32_0 : i32, i32
  }
  func.func @transform_3(%arg0: i32) -> (i32, i32) {
    %c0_i32 = arith.constant 0 : i32
    %c0_i32_0 = arith.constant 0 : i32
    %c0_i32_1 = arith.constant 0 : i32
    return %c0_i32, %c0_i32_0 : i32, i32
  }
  func.func @transform_4(%arg0: i32) -> (i32, i32) {
    %c0_i32 = arith.constant 0 : i32
    %c0_i32_0 = arith.constant 0 : i32
    %c0_i32_1 = arith.constant 0 : i32
    return %c0_i32, %c0_i32_0 : i32, i32
  }
  func.func @transform_5(%arg0: i32) -> (i32, i32) {
    %c0_i32 = arith.constant 0 : i32
    %c0_i32_0 = arith.constant 0 : i32
    %c0_i32_1 = arith.constant 0 : i32
    return %c0_i32, %c0_i32_0 : i32, i32
  }
  func.func @transform_6(%arg0: i32) -> (i32, i32) {
    %c0_i32 = arith.constant 0 : i32
    %c0_i32_0 = arith.constant 0 : i32
    %c0_i32_1 = arith.constant 0 : i32
    return %c0_i32, %c0_i32_0 : i32, i32
  }
  func.func @transform_7(%arg0: i32) -> (i32, i32) {
    %c0_i32 = arith.constant 0 : i32
    %c0_i32_0 = arith.constant 0 : i32
    return %c0_i32, %arg0 : i32, i32
  }
}

</mosaic_0001>

<llo_original>
// kernel: tpu_custom_call.1
$region0: #{tpu_custom_call.1}
  #allocation0 [shape = 'u32[]', space=smem, size = 0x4, offset = 0x4, fixed_abs, tag = 'smem constant byte address 0x4 - core index']
  #allocation1 [shape = 'u32[72,128]{1,0:T(1,128)}', space=vmem, size = 0x9000, scoped, tag = 'internal scratch']
  %s0 = inlined_call_operand.vmem [shape: f32[4,128], index: 0, kind: input, shape index: {}]
  %s1 = inlined_call_operand.vmem [shape: f32[128,4], index: 1, kind: input, shape index: {}]
  %s2 = inlined_call_operand.vmem [shape: f32[128,1], index: 2, kind: input, shape index: {}]
  %s3 = inlined_call_operand.vmem [shape: f32[64,128], index: 3, kind: input, shape index: {}]
  %s4 = inlined_call_operand.vmem [shape: f32[64,1], index: 4, kind: input, shape index: {}]
  %s5 = inlined_call_operand.vmem [shape: f32[8,64], index: 5, kind: input, shape index: {}]
  %s6 = inlined_call_operand.vmem [shape: f32[8,1], index: 6, kind: input, shape index: {}]
  %s7 = inlined_call_operand.hbm [shape: f32[8,128], index: 7, kind: output, shape index: {}]
  %s8 = sld [smem:[#allocation0]]
  $region38: #{tpu_custom_call.1} parent=0
    _
  %s10 = ssub.s32 1, %s8
  %s11 = scalar_select 0, %s10, %s8
  $region1: #{tpu_custom_call.1} parent=0
    #allocation2 [shape = 'u8[4096]{0}', space=vmem, size = 0x1000, scoped, tag = 'output window, operand 0, single buffered']
    #allocation3 [shape = 's32[1]{0}', space=sflag, size = 0x4, scoped, tag = 'scoped memory for tpu_custom_call.1']
    %12 = vsyncpa [#allocation3], 0
    // Predicated region
    $region2: #{tpu_custom_call.1} parent=1 // pred_check
      _
    $region3: #{tpu_custom_call.1} parent=1 // pred_check_branch
      %14 = sbr.rel (0) target = $region5
    $region4: #{tpu_custom_call.1} parent=1 // pred_region
      _
    $region5: #{tpu_custom_call.1} parent=1 // pred_fallthru
      _
    // Predicated region
    $region6: #{tpu_custom_call.1} parent=1 // pred_check
      _
    $region7: #{tpu_custom_call.1} parent=1 // pred_check_branch
      %16 = sbr.rel (0) target = $region9
    $region8: #{tpu_custom_call.1} parent=1 // pred_region
      _
    $region9: #{tpu_custom_call.1} parent=1 // pred_fallthru
      _
    // Predicated region
    $region10: #{tpu_custom_call.1} parent=1 // pred_check
      _
    $region11: #{tpu_custom_call.1} parent=1 // pred_check_branch
      %18 = sbr.rel (0) target = $region13
    $region12: #{tpu_custom_call.1} parent=1 // pred_region
      _
    $region13: #{tpu_custom_call.1} parent=1 // pred_fallthru
      _
    // Predicated region
    $region14: #{tpu_custom_call.1} parent=1 // pred_check
      _
    $region15: #{tpu_custom_call.1} parent=1 // pred_check_branch
      %20 = sbr.rel (0) target = $region17
    $region16: #{tpu_custom_call.1} parent=1 // pred_region
      _
    $region17: #{tpu_custom_call.1} parent=1 // pred_fallthru
      _
    // Predicated region
    $region18: #{tpu_custom_call.1} parent=1 // pred_check
      _
    $region19: #{tpu_custom_call.1} parent=1 // pred_check_branch
      %22 = sbr.rel (0) target = $region21
    $region20: #{tpu_custom_call.1} parent=1 // pred_region
      _
    $region21: #{tpu_custom_call.1} parent=1 // pred_fallthru
      _
    // Predicated region
    $region22: #{tpu_custom_call.1} parent=1 // pred_check
      _
    $region23: #{tpu_custom_call.1} parent=1 // pred_check_branch
      %24 = sbr.rel (0) target = $region25
    $region24: #{tpu_custom_call.1} parent=1 // pred_region
      _
    $region25: #{tpu_custom_call.1} parent=1 // pred_fallthru
      _
    // Predicated region
    $region26: #{tpu_custom_call.1} parent=1 // pred_check
      _
    $region27: #{tpu_custom_call.1} parent=1 // pred_check_branch
      %26 = sbr.rel (0) target = $region29
    $region28: #{tpu_custom_call.1} parent=1 // pred_region
      _
    $region29: #{tpu_custom_call.1} parent=1 // pred_fallthru
      _
    %v27 = vld [vmem:[%s0] sm:$0xf]
    %v28 = vld [vmem:[%s1] sm:$0xff]
    %v29 = vld [vmem:[%s1 + $0x8] sm:$0xff]
    %v30 = vld [vmem:[%s1 + $0x10] sm:$0xff]
    %v31 = vld [vmem:[%s1 + $0x18] sm:$0xff]
    %v32 = vld [vmem:[%s1 + $0x20] sm:$0xff]
    %v33 = vld [vmem:[%s1 + $0x28] sm:$0xff]
    %v34 = vld [vmem:[%s1 + $0x30] sm:$0xff]
    %v35 = vld [vmem:[%s1 + $0x38] sm:$0xff]
    %v36 = vld [vmem:[%s1 + $0x40] sm:$0xff]
    %v37 = vld [vmem:[%s1 + $0x48] sm:$0xff]
    %v38 = vld [vmem:[%s1 + $0x50] sm:$0xff]
    %v39 = vld [vmem:[%s1 + $0x58] sm:$0xff]
    %v40 = vld [vmem:[%s1 + $0x60] sm:$0xff]
    %v41 = vld [vmem:[%s1 + $0x68] sm:$0xff]
    %v42 = vld [vmem:[%s1 + $0x70] sm:$0xff]
    %v43 = vld [vmem:[%s1 + $0x78] sm:$0xff]
    %v44 = vld [vmem:[%s2] sm:$0xff]
    %v45 = vld [vmem:[%s2 + $0x8] sm:$0xff]
    %v46 = vld [vmem:[%s2 + $0x10] sm:$0xff]
    %v47 = vld [vmem:[%s2 + $0x18] sm:$0xff]
    %v48 = vld [vmem:[%s2 + $0x20] sm:$0xff]
    %v49 = vld [vmem:[%s2 + $0x28] sm:$0xff]
    %v50 = vld [vmem:[%s2 + $0x30] sm:$0xff]
    %v51 = vld [vmem:[%s2 + $0x38] sm:$0xff]
    %v52 = vld [vmem:[%s2 + $0x40] sm:$0xff]
    %v53 = vld [vmem:[%s2 + $0x48] sm:$0xff]
    %v54 = vld [vmem:[%s2 + $0x50] sm:$0xff]
    %v55 = vld [vmem:[%s2 + $0x58] sm:$0xff]
    %v56 = vld [vmem:[%s2 + $0x60] sm:$0xff]
    %v57 = vld [vmem:[%s2 + $0x68] sm:$0xff]
    %v58 = vld [vmem:[%s2 + $0x70] sm:$0xff]
    %v59 = vld [vmem:[%s2 + $0x78] sm:$0xff]
    %61 = vset.pattern.permute.xlu0 0
    %62 = vperm.xlu0 %61, %v28
    %v63 = vpop.permute.xlu0 %62
    %66 = vset.pattern.permute.xlu0 0
    %67 = vperm.xlu0 %66, %v29
    %v68 = vpop.permute.xlu0 %67
    %71 = vset.pattern.permute.xlu0 0
    %72 = vperm.xlu0 %71, %v30
    %v73 = vpop.permute.xlu0 %72
    %76 = vset.pattern.permute.xlu0 0
    %77 = vperm.xlu0 %76, %v31
    %v78 = vpop.permute.xlu0 %77
    %81 = vset.pattern.permute.xlu0 0
    %82 = vperm.xlu0 %81, %v32
    %v83 = vpop.permute.xlu0 %82
    %86 = vset.pattern.permute.xlu0 0
    %87 = vperm.xlu0 %86, %v33
    %v88 = vpop.permute.xlu0 %87
    %91 = vset.pattern.permute.xlu0 0
    %92 = vperm.xlu0 %91, %v34
    %v93 = vpop.permute.xlu0 %92
    %96 = vset.pattern.permute.xlu0 0
    %97 = vperm.xlu0 %96, %v35
    %v98 = vpop.permute.xlu0 %97
    %101 = vset.pattern.permute.xlu0 0
    %102 = vperm.xlu0 %101, %v36
    %v103 = vpop.permute.xlu0 %102
    %106 = vset.pattern.permute.xlu0 0
    %107 = vperm.xlu0 %106, %v37
    %v108 = vpop.permute.xlu0 %107
    %111 = vset.pattern.permute.xlu0 0
    %112 = vperm.xlu0 %111, %v38
    %v113 = vpop.permute.xlu0 %112
    %116 = vset.pattern.permute.xlu0 0
    %117 = vperm.xlu0 %116, %v39
    %v118 = vpop.permute.xlu0 %117
    %121 = vset.pattern.permute.xlu0 0
    %122 = vperm.xlu0 %121, %v40
    %v123 = vpop.permute.xlu0 %122
    %126 = vset.pattern.permute.xlu0 0
    %127 = vperm.xlu0 %126, %v41
    %v128 = vpop.permute.xlu0 %127
    %131 = vset.pattern.permute.xlu0 0
    %132 = vperm.xlu0 %131, %v42
    %v133 = vpop.permute.xlu0 %132
    %136 = vset.pattern.permute.xlu0 0
    %137 = vperm.xlu0 %136, %v43
    %v138 = vpop.permute.xlu0 %137
    %v140 = vperm.slane %v27, 0
    %v141 = vmul.f32 %v63, %v140
    %v142 = vmul.f32 %v68, %v140
    %v143 = vmul.f32 %v73, %v140
    %v144 = vmul.f32 %v78, %v140
    %v145 = vmul.f32 %v83, %v140
    %v146 = vmul.f32 %v88, %v140
    %v147 = vmul.f32 %v93, %v140
    %v148 = vmul.f32 %v98, %v140
    %v149 = vmul.f32 %v103, %v140
    %v150 = vmul.f32 %v108, %v140
    %v151 = vmul.f32 %v113, %v140
    %v152 = vmul.f32 %v118, %v140
    %v153 = vmul.f32 %v123, %v140
    %v154 = vmul.f32 %v128, %v140
    %v155 = vmul.f32 %v133, %v140
    %v156 = vmul.f32 %v138, %v140
    %158 = vset.pattern.permute.xlu0 0
    %159 = vperm.xlu0 %158, %v44
    %v160 = vpop.permute.xlu0 %159
    %163 = vset.pattern.permute.xlu0 0
    %164 = vperm.xlu0 %163, %v45
    %v165 = vpop.permute.xlu0 %164
    %168 = vset.pattern.permute.xlu0 0
    %169 = vperm.xlu0 %168, %v46
    %v170 = vpop.permute.xlu0 %169
    %173 = vset.pattern.permute.xlu0 0
    %174 = vperm.xlu0 %173, %v47
    %v175 = vpop.permute.xlu0 %174
    %178 = vset.pattern.permute.xlu0 0
    %179 = vperm.xlu0 %178, %v48
    %v180 = vpop.permute.xlu0 %179
    %183 = vset.pattern.permute.xlu0 0
    %184 = vperm.xlu0 %183, %v49
    %v185 = vpop.permute.xlu0 %184
    %188 = vset.pattern.permute.xlu0 0
    %189 = vperm.xlu0 %188, %v50
    %v190 = vpop.permute.xlu0 %189
    %193 = vset.pattern.permute.xlu0 0
    %194 = vperm.xlu0 %193, %v51
    %v195 = vpop.permute.xlu0 %194
    %198 = vset.pattern.permute.xlu0 0
    %199 = vperm.xlu0 %198, %v52
    %v200 = vpop.permute.xlu0 %199
    %203 = vset.pattern.permute.xlu0 0
    %204 = vperm.xlu0 %203, %v53
    %v205 = vpop.permute.xlu0 %204
    %208 = vset.pattern.permute.xlu0 0
    %209 = vperm.xlu0 %208, %v54
    %v210 = vpop.permute.xlu0 %209
    %213 = vset.pattern.permute.xlu0 0
    %214 = vperm.xlu0 %213, %v55
    %v215 = vpop.permute.xlu0 %214
    %218 = vset.pattern.permute.xlu0 0
    %219 = vperm.xlu0 %218, %v56
    %v220 = vpop.permute.xlu0 %219
    %223 = vset.pattern.permute.xlu0 0
    %224 = vperm.xlu0 %223, %v57
    %v225 = vpop.permute.xlu0 %224
    %228 = vset.pattern.permute.xlu0 0
    %229 = vperm.xlu0 %228, %v58
    %v230 = vpop.permute.xlu0 %229
    %233 = vset.pattern.permute.xlu0 0
    %234 = vperm.xlu0 %233, %v59
    %v235 = vpop.permute.xlu0 %234
    %v237 = vadd.f32 %v160, %v141
    %v238 = vadd.f32 %v165, %v142
    %v239 = vadd.f32 %v170, %v143
    %v240 = vadd.f32 %v175, %v144
    %v241 = vadd.f32 %v180, %v145
    %v242 = vadd.f32 %v185, %v146
    %v243 = vadd.f32 %v190, %v147
    %v244 = vadd.f32 %v195, %v148
    %v245 = vadd.f32 %v200, %v149
    %v246 = vadd.f32 %v205, %v150
    %v247 = vadd.f32 %v210, %v151
    %v248 = vadd.f32 %v215, %v152
    %v249 = vadd.f32 %v220, %v153
    %v250 = vadd.f32 %v225, %v154
    %v251 = vadd.f32 %v230, %v155
    %v252 = vadd.f32 %v235, %v156
    %253 = vset.pattern.permute.xlu0 1
    %254 = vperm.xlu0 %253, %v28
    %v255 = vpop.permute.xlu0 %254
    %257 = vset.pattern.permute.xlu0 1
    %258 = vperm.xlu0 %257, %v29
    %v259 = vpop.permute.xlu0 %258
    %261 = vset.pattern.permute.xlu0 1
    %262 = vperm.xlu0 %261, %v30
    %v263 = vpop.permute.xlu0 %262
    %265 = vset.pattern.permute.xlu0 1
    %266 = vperm.xlu0 %265, %v31
    %v267 = vpop.permute.xlu0 %266
    %269 = vset.pattern.permute.xlu0 1
    %270 = vperm.xlu0 %269, %v32
    %v271 = vpop.permute.xlu0 %270
    %273 = vset.pattern.permute.xlu0 1
    %274 = vperm.xlu0 %273, %v33
    %v275 = vpop.permute.xlu0 %274
    %277 = vset.pattern.permute.xlu0 1
    %278 = vperm.xlu0 %277, %v34
    %v279 = vpop.permute.xlu0 %278
    %281 = vset.pattern.permute.xlu0 1
    %282 = vperm.xlu0 %281, %v35
    %v283 = vpop.permute.xlu0 %282
    %285 = vset.pattern.permute.xlu0 1
    %286 = vperm.xlu0 %285, %v36
    %v287 = vpop.permute.xlu0 %286
    %289 = vset.pattern.permute.xlu0 1
    %290 = vperm.xlu0 %289, %v37
    %v291 = vpop.permute.xlu0 %290
    %293 = vset.pattern.permute.xlu0 1
    %294 = vperm.xlu0 %293, %v38
    %v295 = vpop.permute.xlu0 %294
    %297 = vset.pattern.permute.xlu0 1
    %298 = vperm.xlu0 %297, %v39
    %v299 = vpop.permute.xlu0 %298
    %301 = vset.pattern.permute.xlu0 1
    %302 = vperm.xlu0 %301, %v40
    %v303 = vpop.permute.xlu0 %302
    %305 = vset.pattern.permute.xlu0 1
    %306 = vperm.xlu0 %305, %v41
    %v307 = vpop.permute.xlu0 %306
    %309 = vset.pattern.permute.xlu0 1
    %310 = vperm.xlu0 %309, %v42
    %v311 = vpop.permute.xlu0 %310
    %313 = vset.pattern.permute.xlu0 1
    %314 = vperm.xlu0 %313, %v43
    %v315 = vpop.permute.xlu0 %314
    %v317 = vperm.slane %v27, 1
    %v318 = vmul.f32 %v255, %v317
    %v319 = vmul.f32 %v259, %v317
    %v320 = vmul.f32 %v263, %v317
    %v321 = vmul.f32 %v267, %v317
    %v322 = vmul.f32 %v271, %v317
    %v323 = vmul.f32 %v275, %v317
    %v324 = vmul.f32 %v279, %v317
    %v325 = vmul.f32 %v283, %v317
    %v326 = vmul.f32 %v287, %v317
    %v327 = vmul.f32 %v291, %v317
    %v328 = vmul.f32 %v295, %v317
    %v329 = vmul.f32 %v299, %v317
    %v330 = vmul.f32 %v303, %v317
    %v331 = vmul.f32 %v307, %v317
    %v332 = vmul.f32 %v311, %v317
    %v333 = vmul.f32 %v315, %v317
    %v334 = vadd.f32 %v237, %v318
    %v335 = vadd.f32 %v238, %v319
    %v336 = vadd.f32 %v239, %v320
    %v337 = vadd.f32 %v240, %v321
    %v338 = vadd.f32 %v241, %v322
    %v339 = vadd.f32 %v242, %v323
    %v340 = vadd.f32 %v243, %v324
    %v341 = vadd.f32 %v244, %v325
    %v342 = vadd.f32 %v245, %v326
    %v343 = vadd.f32 %v246, %v327
    %v344 = vadd.f32 %v247, %v328
    %v345 = vadd.f32 %v248, %v329
    %v346 = vadd.f32 %v249, %v330
    %v347 = vadd.f32 %v250, %v331
    %v348 = vadd.f32 %v251, %v332
    %v349 = vadd.f32 %v252, %v333
    %350 = vset.pattern.permute.xlu0 2
    %351 = vperm.xlu0 %350, %v28
    %v352 = vpop.permute.xlu0 %351
    %354 = vset.pattern.permute.xlu0 2
    %355 = vperm.xlu0 %354, %v29
    %v356 = vpop.permute.xlu0 %355
    %358 = vset.pattern.permute.xlu0 2
    %359 = vperm.xlu0 %358, %v30
    %v360 = vpop.permute.xlu0 %359
    %362 = vset.pattern.permute.xlu0 2
    %363 = vperm.xlu0 %362, %v31
    %v364 = vpop.permute.xlu0 %363
    %366 = vset.pattern.permute.xlu0 2
    %367 = vperm.xlu0 %366, %v32
    %v368 = vpop.permute.xlu0 %367
    %370 = vset.pattern.permute.xlu0 2
    %371 = vperm.xlu0 %370, %v33
    %v372 = vpop.permute.xlu0 %371
    %374 = vset.pattern.permute.xlu0 2
    %375 = vperm.xlu0 %374, %v34
    %v376 = vpop.permute.xlu0 %375
    %378 = vset.pattern.permute.xlu0 2
    %379 = vperm.xlu0 %378, %v35
    %v380 = vpop.permute.xlu0 %379
    %382 = vset.pattern.permute.xlu0 2
    %383 = vperm.xlu0 %382, %v36
    %v384 = vpop.permute.xlu0 %383
    %386 = vset.pattern.permute.xlu0 2
    %387 = vperm.xlu0 %386, %v37
    %v388 = vpop.permute.xlu0 %387
    %390 = vset.pattern.permute.xlu0 2
    %391 = vperm.xlu0 %390, %v38
    %v392 = vpop.permute.xlu0 %391
    %394 = vset.pattern.permute.xlu0 2
    %395 = vperm.xlu0 %394, %v39
    %v396 = vpop.permute.xlu0 %395
    %398 = vset.pattern.permute.xlu0 2
    %399 = vperm.xlu0 %398, %v40
    %v400 = vpop.permute.xlu0 %399
    %402 = vset.pattern.permute.xlu0 2
    %403 = vperm.xlu0 %402, %v41
    %v404 = vpop.permute.xlu0 %403
    %406 = vset.pattern.permute.xlu0 2
    %407 = vperm.xlu0 %406, %v42
    %v408 = vpop.permute.xlu0 %407
    %410 = vset.pattern.permute.xlu0 2
    %411 = vperm.xlu0 %410, %v43
    %v412 = vpop.permute.xlu0 %411
    %v414 = vperm.slane %v27, 2
    %v415 = vmul.f32 %v352, %v414
    %v416 = vmul.f32 %v356, %v414
    %v417 = vmul.f32 %v360, %v414
    %v418 = vmul.f32 %v364, %v414
    %v419 = vmul.f32 %v368, %v414
    %v420 = vmul.f32 %v372, %v414
    %v421 = vmul.f32 %v376, %v414
    %v422 = vmul.f32 %v380, %v414
    %v423 = vmul.f32 %v384, %v414
    %v424 = vmul.f32 %v388, %v414
    %v425 = vmul.f32 %v392, %v414
    %v426 = vmul.f32 %v396, %v414
    %v427 = vmul.f32 %v400, %v414
    %v428 = vmul.f32 %v404, %v414
    %v429 = vmul.f32 %v408, %v414
    %v430 = vmul.f32 %v412, %v414
    %v431 = vadd.f32 %v334, %v415
    %v432 = vadd.f32 %v335, %v416
    %v433 = vadd.f32 %v336, %v417
    %v434 = vadd.f32 %v337, %v418
    %v435 = vadd.f32 %v338, %v419
    %v436 = vadd.f32 %v339, %v420
    %v437 = vadd.f32 %v340, %v421
    %v438 = vadd.f32 %v341, %v422
    %v439 = vadd.f32 %v342, %v423
    %v440 = vadd.f32 %v343, %v424
    %v441 = vadd.f32 %v344, %v425
    %v442 = vadd.f32 %v345, %v426
    %v443 = vadd.f32 %v346, %v427
    %v444 = vadd.f32 %v347, %v428
    %v445 = vadd.f32 %v348, %v429
    %v446 = vadd.f32 %v349, %v430
    %447 = vset.pattern.permute.xlu0 3
    %448 = vperm.xlu0 %447, %v28
    %v449 = vpop.permute.xlu0 %448
    %451 = vset.pattern.permute.xlu0 3
    %452 = vperm.xlu0 %451, %v29
    %v453 = vpop.permute.xlu0 %452
    %455 = vset.pattern.permute.xlu0 3
    %456 = vperm.xlu0 %455, %v30
    %v457 = vpop.permute.xlu0 %456
    %459 = vset.pattern.permute.xlu0 3
    %460 = vperm.xlu0 %459, %v31
    %v461 = vpop.permute.xlu0 %460
    %463 = vset.pattern.permute.xlu0 3
    %464 = vperm.xlu0 %463, %v32
    %v465 = vpop.permute.xlu0 %464
    %467 = vset.pattern.permute.xlu0 3
    %468 = vperm.xlu0 %467, %v33
    %v469 = vpop.permute.xlu0 %468
    %471 = vset.pattern.permute.xlu0 3
    %472 = vperm.xlu0 %471, %v34
    %v473 = vpop.permute.xlu0 %472
    %475 = vset.pattern.permute.xlu0 3
    %476 = vperm.xlu0 %475, %v35
    %v477 = vpop.permute.xlu0 %476
    %479 = vset.pattern.permute.xlu0 3
    %480 = vperm.xlu0 %479, %v36
    %v481 = vpop.permute.xlu0 %480
    %483 = vset.pattern.permute.xlu0 3
    %484 = vperm.xlu0 %483, %v37
    %v485 = vpop.permute.xlu0 %484
    %487 = vset.pattern.permute.xlu0 3
    %488 = vperm.xlu0 %487, %v38
    %v489 = vpop.permute.xlu0 %488
    %491 = vset.pattern.permute.xlu0 3
    %492 = vperm.xlu0 %491, %v39
    %v493 = vpop.permute.xlu0 %492
    %495 = vset.pattern.permute.xlu0 3
    %496 = vperm.xlu0 %495, %v40
    %v497 = vpop.permute.xlu0 %496
    %499 = vset.pattern.permute.xlu0 3
    %500 = vperm.xlu0 %499, %v41
    %v501 = vpop.permute.xlu0 %500
    %503 = vset.pattern.permute.xlu0 3
    %504 = vperm.xlu0 %503, %v42
    %v505 = vpop.permute.xlu0 %504
    %507 = vset.pattern.permute.xlu0 3
    %508 = vperm.xlu0 %507, %v43
    %v509 = vpop.permute.xlu0 %508
    %v511 = vperm.slane %v27, 3
    %v512 = vmul.f32 %v449, %v511
    %v513 = vmul.f32 %v453, %v511
    %v514 = vmul.f32 %v457, %v511
    %v515 = vmul.f32 %v461, %v511
    %v516 = vmul.f32 %v465, %v511
    %v517 = vmul.f32 %v469, %v511
    %v518 = vmul.f32 %v473, %v511
    %v519 = vmul.f32 %v477, %v511
    %v520 = vmul.f32 %v481, %v511
    %v521 = vmul.f32 %v485, %v511
    %v522 = vmul.f32 %v489, %v511
    %v523 = vmul.f32 %v493, %v511
    %v524 = vmul.f32 %v497, %v511
    %v525 = vmul.f32 %v501, %v511
    %v526 = vmul.f32 %v505, %v511
    %v527 = vmul.f32 %v509, %v511
    %v528 = vadd.f32 %v431, %v512
    %v529 = vadd.f32 %v432, %v513
    %v530 = vadd.f32 %v433, %v514
    %v531 = vadd.f32 %v434, %v515
    %v532 = vadd.f32 %v435, %v516
    %v533 = vadd.f32 %v436, %v517
    %v534 = vadd.f32 %v437, %v518
    %v535 = vadd.f32 %v438, %v519
    %v536 = vadd.f32 %v439, %v520
    %v537 = vadd.f32 %v440, %v521
    %v538 = vadd.f32 %v441, %v522
    %v539 = vadd.f32 %v442, %v523
    %v540 = vadd.f32 %v443, %v524
    %v541 = vadd.f32 %v444, %v525
    %v542 = vadd.f32 %v445, %v526
    %v543 = vadd.f32 %v446, %v527
    %v544 = vmax.f32 %v528, 0.0
    %v545 = vmax.f32 %v529, 0.0
    %v546 = vmax.f32 %v530, 0.0
    %v547 = vmax.f32 %v531, 0.0
    %v548 = vmax.f32 %v532, 0.0
    %v549 = vmax.f32 %v533, 0.0
    %v550 = vmax.f32 %v534, 0.0
    %v551 = vmax.f32 %v535, 0.0
    %v552 = vmax.f32 %v536, 0.0
    %v553 = vmax.f32 %v537, 0.0
    %v554 = vmax.f32 %v538, 0.0
    %v555 = vmax.f32 %v539, 0.0
    %v556 = vmax.f32 %v540, 0.0
    %v557 = vmax.f32 %v541, 0.0
    %v558 = vmax.f32 %v542, 0.0
    %v559 = vmax.f32 %v543, 0.0
    %v560 = vld [vmem:[%s3] sm:$0xff]
    %v561 = vld [vmem:[%s3 + $0x8] sm:$0xff]
    %v562 = vld [vmem:[%s3 + $0x10] sm:$0xff]
    %v563 = vld [vmem:[%s3 + $0x18] sm:$0xff]
    %v564 = vld [vmem:[%s3 + $0x20] sm:$0xff]
    %v565 = vld [vmem:[%s3 + $0x28] sm:$0xff]
    %v566 = vld [vmem:[%s3 + $0x30] sm:$0xff]
    %v567 = vld [vmem:[%s3 + $0x38] sm:$0xff]
    %v568 = vld [vmem:[%s4] sm:$0xff]
    %v569 = vld [vmem:[%s4 + $0x8] sm:$0xff]
    %v570 = vld [vmem:[%s4 + $0x10] sm:$0xff]
    %v571 = vld [vmem:[%s4 + $0x18] sm:$0xff]
    %v572 = vld [vmem:[%s4 + $0x20] sm:$0xff]
    %v573 = vld [vmem:[%s4 + $0x28] sm:$0xff]
    %v574 = vld [vmem:[%s4 + $0x30] sm:$0xff]
    %v575 = vld [vmem:[%s4 + $0x38] sm:$0xff]
    %577 = vset.pattern.permute.xlu0 0
    %578 = vperm.xlu0 %577, %v568
    %v579 = vpop.permute.xlu0 %578
    %582 = vset.pattern.permute.xlu0 0
    %583 = vperm.xlu0 %582, %v569
    %v584 = vpop.permute.xlu0 %583
    %587 = vset.pattern.permute.xlu0 0
    %588 = vperm.xlu0 %587, %v570
    %v589 = vpop.permute.xlu0 %588
    %592 = vset.pattern.permute.xlu0 0
    %593 = vperm.xlu0 %592, %v571
    %v594 = vpop.permute.xlu0 %593
    %597 = vset.pattern.permute.xlu0 0
    %598 = vperm.xlu0 %597, %v572
    %v599 = vpop.permute.xlu0 %598
    %602 = vset.pattern.permute.xlu0 0
    %603 = vperm.xlu0 %602, %v573
    %v604 = vpop.permute.xlu0 %603
    %607 = vset.pattern.permute.xlu0 0
    %608 = vperm.xlu0 %607, %v574
    %v609 = vpop.permute.xlu0 %608
    %612 = vset.pattern.permute.xlu0 0
    %613 = vperm.xlu0 %612, %v575
    %v614 = vpop.permute.xlu0 %613
    %616 = vmatpush.msra.mxu0 %v559
    %617 = vmatpush.msra.mxu0 %v558
    %618 = vmatpush.msra.mxu0 %v557
    %619 = vmatpush.msra.mxu0 %v556
    %620 = vmatpush.msra.mxu0 %v555
    %621 = vmatpush.msra.mxu0 %v554
    %622 = vmatpush.msra.mxu0 %v553
    %623 = vmatpush.msra.mxu0 %v552
    %624 = vmatpush.msra.mxu0 %v551
    %625 = vmatpush.msra.mxu0 %v550
    %626 = vmatpush.msra.mxu0 %v549
    %627 = vmatpush.msra.mxu0 %v548
    %628 = vmatpush.msra.mxu0 %v547
    %629 = vmatpush.msra.mxu0 %v546
    %630 = vmatpush.msra.mxu0 %v545
    %631 = vmatpush.msra.mxu0 %v544
    %632 = vmatmul.f32.gmra.mxu0 %v560
    %v633 = vpop.f32.mrf.mxu0
    %v634 = vadd.f32 %v579, %v633
    %635 = vmatmul.f32.gmra.mxu0 %v561
    %v636 = vpop.f32.mrf.mxu0
    %v637 = vadd.f32 %v584, %v636
    %638 = vmatmul.f32.gmra.mxu0 %v562
    %v639 = vpop.f32.mrf.mxu0
    %v640 = vadd.f32 %v589, %v639
    %641 = vmatmul.f32.gmra.mxu0 %v563
    %v642 = vpop.f32.mrf.mxu0
    %v643 = vadd.f32 %v594, %v642
    %644 = vmatmul.f32.gmra.mxu0 %v564
    %v645 = vpop.f32.mrf.mxu0
    %v646 = vadd.f32 %v599, %v645
    %647 = vmatmul.f32.gmra.mxu0 %v565
    %v648 = vpop.f32.mrf.mxu0
    %v649 = vadd.f32 %v604, %v648
    %650 = vmatmul.f32.gmra.mxu0 %v566
    %v651 = vpop.f32.mrf.mxu0
    %v652 = vadd.f32 %v609, %v651
    %653 = vmatmul.f32.gmra.mxu0 %v567
    %v654 = vpop.f32.mrf.mxu0
    %v655 = vadd.f32 %v614, %v654
    %656 = vdwg.mxu0
    %v657 = vmax.f32 %v634, 0.0
    %v658 = vmax.f32 %v637, 0.0
    %v659 = vmax.f32 %v640, 0.0
    %v660 = vmax.f32 %v643, 0.0
    %v661 = vmax.f32 %v646, 0.0
    %v662 = vmax.f32 %v649, 0.0
    %v663 = vmax.f32 %v652, 0.0
    %v664 = vmax.f32 %v655, 0.0
    %v665 = vld [vmem:[%s5] sm:$0xff]
    %v666 = vld [vmem:[%s6] sm:$0xff]
    %668 = vset.pattern.permute.xlu0 0
    %669 = vperm.xlu0 %668, %v666
    %v670 = vpop.permute.xlu0 %669
    %vm672 = vcmask 523264
    %v674 = vsel %vm672, %v665, 0
    %676 = vmatpush.msra.mxu0 0.0
    %677 = vmatpush.msra.mxu0 0.0
    %678 = vmatpush.msra.mxu0 0.0
    %679 = vmatpush.msra.mxu0 0.0
    %680 = vmatpush.msra.mxu0 0.0
    %681 = vmatpush.msra.mxu0 0.0
    %682 = vmatpush.msra.mxu0 0.0
    %683 = vmatpush.msra.mxu0 0.0
    %684 = vmatpush.msra.mxu0 %v664
    %685 = vmatpush.msra.mxu0 %v663
    %686 = vmatpush.msra.mxu0 %v662
    %687 = vmatpush.msra.mxu0 %v661
    %688 = vmatpush.msra.mxu0 %v660
    %689 = vmatpush.msra.mxu0 %v659
    %690 = vmatpush.msra.mxu0 %v658
    %691 = vmatpush.msra.mxu0 %v657
    %692 = vmatmul.f32.gmra.mxu0 %v674
    %v693 = vpop.f32.mrf.mxu0
    %v694 = vadd.f32 %v670, %v693
    %695 = vdwg.mxu0
    %vm696 = vcmask 1041408
    %v697 = vsel %vm696, %v694, -inf
    %v698 = vrot.slane %v697, 4
    %v699 = vmax.f32 %v697, %v698
    %v700 = vrot.slane %v699, 2
    %v701 = vmax.f32 %v699, %v700
    %v702 = vrot.slane %v701, 1
    %v703 = vmax.f32 %v701, %v702
    %v704 = vsub.f32 %v694, %v703
    %v705 = vmul.f32 %v704, 1.442695
    %v706 = vpow.pop %v705
    %v707 = vsel %vm696, %v706, 0.0
    %v708 = vrot.slane %v707, 4
    %v709 = vadd.f32 %v707, %v708
    %v710 = vrot.slane %v709, 2
    %v711 = vadd.f32 %v709, %v710
    %v712 = vrot.slane %v711, 1
    %v713 = vadd.f32 %v711, %v712
    %v714 = vrcp.pop %v713
    %v715 = vmul.f32 %v713, %v714
    %v716 = vsub.f32 1.0, %v715
    %v717 = vmul.f32 %v714, %v716
    %v718 = vadd.f32 %v714, %v717
    %vm719 = vweird.f32 %v713
    %vm720 = vweird.f32 %v714
    %vm721 = vmor %vm719, %vm720
    %v722 = vsel %vm721, %v714, %v718
    %v723 = vand.u32 2147483647, %v713
    %vm724 = vcmp.eq.f32.partialorder %v723, 8.507059e+37
    %v725 = vand.u32 %v713, 2147483648
    %v726 = vor.u32 1.1754944e-38, %v725
    %v727 = vsel %vm724, %v726, %v722
    %v728 = vmul.f32 %v706, %v727
    %729 = vst [vmem:[#allocation2] sm:$0xff] %v694
    %730 = vst [vmem:[#allocation2 + $0x2] sm:$0x3] %v728
    // Predicated region
    $region30: #{tpu_custom_call.1} parent=1 // pred_check
      _
    $region31: #{tpu_custom_call.1} parent=1 // pred_check_branch
      %732 = sbr.rel (0) target = $region33
    $region32: #{tpu_custom_call.1} parent=1 // pred_region
      %734 = vsyncadd [#allocation3], 0
      %s736 = sshll.u32 [#allocation2], 4
      %s737 = int_to_ptr.vmem [resolvable:$true] %s736
      %s738 = sshll.u32 %s7, 4
      %s739 = int_to_ptr.hbm [resolvable:$true] %s738
      %741 = dma.vmem_to_hbm [thread:$0]  %s737, 128, %s739, [#allocation3]
    $region33: #{tpu_custom_call.1} parent=1 // pred_fallthru
      _
    // Predicated region
    $region34: #{tpu_custom_call.1} parent=1 // pred_check
      _
    $region35: #{tpu_custom_call.1} parent=1 // pred_check_branch
      %743 = sbr.rel (0) target = $region37
    $region36: #{tpu_custom_call.1} parent=1 // pred_region
      %745 = dma.done [#allocation3], 128
    $region37: #{tpu_custom_call.1} parent=1 // pred_fallthru
      _
    %746 = vsyncpa [#allocation3], 1

</llo_original>
